<compile_context>
chip_gen: v6e
topology: v6e:2x2x1
jax: 0.10.0
libtpu: 0.0.40
codegen_flags: <defaults>
</compile_context>

<pallas_src>
import functools

import jax
import jax.numpy as jnp
from jax.experimental import pallas as pl
from jax.experimental.pallas import tpu as pltpu

_NEG = -1e30  # finite "-inf" so masked online-softmax updates never hit inf - inf


def _round_up(x, m):
    return (x + m - 1) // m * m


def _clip_loss_kernel(scale_ref, img_ref, txt_ref, loss_ref,
                      row_m_ref, row_s_ref, row_acc_ref, diag_acc_ref,
                      col_m_ref, col_s_ref, col_acc_ref,
                      *, n_valid, block, masked):
    i = pl.program_id(0)          # image (row) block -- outer axis
    j = pl.program_id(1)          # text (column) block -- inner / fastest axis
    ni = pl.num_programs(0)
    nj = pl.num_programs(1)

    scale = scale_ref[0, 0]       # f32 scalar from SMEM

    img = img_ref[...]            # (T, D) image rows (native dtype)
    txt = txt_ref[...]            # (T, D) text rows  (native dtype)

    # (T, T) similarity tile: contract the feature dim of both operands on the
    # MXU with f32 accumulation; no explicit transpose is materialized.
    raw = jax.lax.dot_general(
        img, txt,
        dimension_numbers=(((1,), (1,)), ((), ())),
        preferred_element_type=jnp.float32)

    # Scale in f32 on the logits tile; fuse with the padding mask when needed.
    if masked:
        row_ids = i * block + jax.lax.broadcasted_iota(jnp.int32, (block, 1), 0)
        col_ids = j * block + jax.lax.broadcasted_iota(jnp.int32, (1, block), 1)
        logits = jnp.where((row_ids < n_valid) & (col_ids < n_valid),
                           raw * scale, _NEG)
    else:
        logits = raw * scale

    # ---- init global accumulators on the very first grid step --------------
    @pl.when((i == 0) & (j == 0))
    def _():
        row_acc_ref[...] = jnp.zeros_like(row_acc_ref)
        col_acc_ref[...] = jnp.zeros_like(col_acc_ref)
        diag_acc_ref[...] = jnp.zeros_like(diag_acc_ref)

    # ---- online row-wise logsumexp (logits_per_image direction) ------------
    @pl.when(j == 0)
    def _():
        row_m_ref[...] = jnp.full_like(row_m_ref, _NEG)
        row_s_ref[...] = jnp.zeros_like(row_s_ref)

    rm_prev = row_m_ref[...]                                       # (T, 1)
    rm_new = jnp.maximum(rm_prev, jnp.max(logits, axis=1, keepdims=True))
    row_s_ref[...] = (row_s_ref[...] * jnp.exp(rm_prev - rm_new)
                      + jnp.sum(jnp.exp(logits - rm_new), axis=1, keepdims=True))
    row_m_ref[...] = rm_new

    @pl.when(j == nj - 1)
    def _():
        row_lse = row_m_ref[...] + jnp.log(row_s_ref[...])         # (T, 1)
        if masked:
            rv = (i * block
                  + jax.lax.broadcasted_iota(jnp.int32, (block, 1), 0)) < n_valid
            row_lse = jnp.where(rv, row_lse, 0.0)
        row_acc_ref[...] += row_lse

    # ---- online column-wise logsumexp (logits_per_text direction) ----------
    @pl.when(i == 0)
    def _():
        col_m_ref[j] = jnp.full((1, block), _NEG, jnp.float32)
        col_s_ref[j] = jnp.zeros((1, block), jnp.float32)

    cm_prev = col_m_ref[j]                                         # (1, T)
    cm_new = jnp.maximum(cm_prev, jnp.max(logits, axis=0, keepdims=True))
    col_s_ref[j] = (col_s_ref[j] * jnp.exp(cm_prev - cm_new)
                    + jnp.sum(jnp.exp(logits - cm_new), axis=0, keepdims=True))
    col_m_ref[j] = cm_new

    @pl.when(i == ni - 1)
    def _():
        col_lse = col_m_ref[j] + jnp.log(col_s_ref[j])             # (1, T)
        if masked:
            cv = (j * block
                  + jax.lax.broadcasted_iota(jnp.int32, (1, block), 1)) < n_valid
            col_lse = jnp.where(cv, col_lse, 0.0)
        col_acc_ref[...] += col_lse

    # ---- diagonal: paired row-dot of the matching (i == j) tiles ------------
    @pl.when(i == j)
    def _():
        # Raw (unscaled) diagonal; scale applied once at finalize. Zero-padded
        # rows contribute exactly 0, so no masking is needed here.
        diag_acc_ref[...] += jnp.sum(
            img.astype(jnp.float32) * txt.astype(jnp.float32),
            axis=1, keepdims=True)

    # ---- finalize the scalar loss on the last grid step ---------------------
    @pl.when((i == ni - 1) & (j == nj - 1))
    def _():
        sum_row = jnp.sum(row_acc_ref[...])
        sum_col = jnp.sum(col_acc_ref[...])
        sum_diag = scale * jnp.sum(diag_acc_ref[...])
        loss = (sum_row + sum_col - 2.0 * sum_diag) / jnp.float32(2 * n_valid)
        loss_ref[...] = jnp.full(loss_ref.shape, loss, jnp.float32)


def clip_loss(image_features, text_features, logit_scale, *, block_size=None):
    """ClipLoss.forward (world_size == 1). Returns a scalar f32 loss."""
    n, d = image_features.shape
    assert text_features.shape == (n, d)

    if block_size is None:
        block = min(256, _round_up(n, 8))
    else:
        block = max(8, _round_up(block_size, 8))
    n_pad = _round_up(n, block)
    nb = n_pad // block
    masked = n_pad != n

    img = image_features
    txt = text_features
    if masked:
        pad = ((0, n_pad - n), (0, 0))
        img = jnp.pad(img, pad)
        txt = jnp.pad(txt, pad)

    scale = jnp.asarray(logit_scale, jnp.float32).reshape(1, 1)

    kernel = functools.partial(_clip_loss_kernel,
                               n_valid=n, block=block, masked=masked)

    # VMEM budget: double-buffered feature tiles + logits/exp temporaries +
    # accumulators; clamp to [16 MiB, 64 MiB] so it also fits v7x's 64 MiB.
    itemsize = jnp.dtype(img.dtype).itemsize
    vmem_est = (4 * block * d * itemsize       # 2 inputs x 2 pipeline buffers
                + 8 * block * block * 4        # logits tile + exp/where temps
                + 2 * nb * block * 4           # column accumulators
                + 8 * block * 4                # row / diag accumulators
                + (1 << 20))                   # slack
    vmem_limit = int(min(max(2 * vmem_est, 16 << 20), 64 << 20))

    out = pl.pallas_call(
        kernel,
        out_shape=jax.ShapeDtypeStruct((1, 128), jnp.float32),
        grid_spec=pltpu.PrefetchScalarGridSpec(
            num_scalar_prefetch=0,
            grid=(nb, nb),
            in_specs=[
                pl.BlockSpec(memory_space=pltpu.MemorySpace.SMEM),   # logit_scale
                pl.BlockSpec((block, d), lambda i, j: (i, 0)),       # image rows
                pl.BlockSpec((block, d), lambda i, j: (j, 0)),       # text rows
            ],
            out_specs=pl.BlockSpec((1, 128), lambda i, j: (0, 0)),   # lane-dense scalar
            scratch_shapes=[
                pltpu.VMEM((block, 1), jnp.float32),      # row running max
                pltpu.VMEM((block, 1), jnp.float32),      # row running sum-exp
                pltpu.VMEM((block, 1), jnp.float32),      # accumulated row lse
                pltpu.VMEM((block, 1), jnp.float32),      # accumulated paired diag
                pltpu.VMEM((nb, 1, block), jnp.float32),  # column running max
                pltpu.VMEM((nb, 1, block), jnp.float32),  # column running sum-exp
                pltpu.VMEM((1, block), jnp.float32),      # accumulated column lse
            ],
        ),
        compiler_params=pltpu.CompilerParams(
            # Both axes carry online-softmax state across steps -> arbitrary.
            dimension_semantics=("arbitrary", "arbitrary"),
            vmem_limit_bytes=vmem_limit,
        ),
    )(scale, img, txt)
    return out[0, 0]


def _clip_loss_ref(image_features, text_features, logit_scale):
    logits = logit_scale * image_features @ text_features.T
    n = logits.shape[0]
    labels = jnp.arange(n)

    def ce(lg):
        lse = jax.nn.logsumexp(lg, axis=-1)
        picked = lg[jnp.arange(n), labels]
        return jnp.mean(lse - picked)

    return 0.5 * (ce(logits) + ce(logits.T))


if __name__ == "__main__":
    key = jax.random.PRNGKey(0)
    k1, k2 = jax.random.split(key)

    N, D = 24, 32  # 24 paired (image, text) embeddings, hidden dim 32
    image_features = jax.random.normal(k1, (N, D), dtype=jnp.float32)
    text_features = jax.random.normal(k2, (N, D), dtype=jnp.float32)
    image_features = image_features / jnp.linalg.norm(image_features, axis=-1, keepdims=True)
    text_features = text_features / jnp.linalg.norm(text_features, axis=-1, keepdims=True)
    logit_scale = jnp.float32(1.0 / 0.07)  # CLIP init: exp(log(1/0.07))

    # Tiled path: 3 x 3 grid of 8 x 8 logits tiles (exercises online row/col
    # logsumexp accumulation and the diagonal-block paired row-dot).
    loss = clip_loss(image_features, text_features, logit_scale, block_size=8)
    jax.block_until_ready(loss)
    ref = _clip_loss_ref(image_features, text_features, logit_scale)
    assert jnp.allclose(loss, ref, rtol=1e-4, atol=1e-4), (loss, ref)

    # Single-tile path (whole padded matrix in one block).
    loss1 = clip_loss(image_features, text_features, logit_scale)
    jax.block_until_ready(loss1)
    assert jnp.allclose(loss1, ref, rtol=1e-4, atol=1e-4), (loss1, ref)

    # Ragged path: N not divisible by the tile -> padded rows/cols are masked.
    N2 = 20
    loss2 = clip_loss(image_features[:N2], text_features[:N2], logit_scale,
                      block_size=8)
    jax.block_until_ready(loss2)
    ref2 = _clip_loss_ref(image_features[:N2], text_features[:N2], logit_scale)
    assert jnp.allclose(loss2, ref2, rtol=1e-4, atol=1e-4), (loss2, ref2)

    print("KERNEL_OK")
</pallas_src>

<mosaic_0001>
module attributes {stable_mosaic.version = 11 : i64} {
  func.func @_clip_loss_kernel(%arg0: i32, %arg1: i32, %arg2: memref<1x1xf32, #tpu.memory_space<smem>>, %arg3: memref<8x32xf32, #tpu.memory_space<vmem>>, %arg4: memref<8x32xf32, #tpu.memory_space<vmem>>, %arg5: memref<1x128xf32, #tpu.memory_space<vmem>>, %arg6: memref<8x1xf32, #tpu.memory_space<vmem>>, %arg7: memref<8x1xf32, #tpu.memory_space<vmem>>, %arg8: memref<8x1xf32, #tpu.memory_space<vmem>>, %arg9: memref<8x1xf32, #tpu.memory_space<vmem>>, %arg10: memref<3x1x8xf32, #tpu.memory_space<vmem>>, %arg11: memref<3x1x8xf32, #tpu.memory_space<vmem>>, %arg12: memref<1x8xf32, #tpu.memory_space<vmem>>) attributes {dimension_semantics = [#tpu.dimension_semantics<arbitrary>, #tpu.dimension_semantics<arbitrary>], iteration_bounds = array<i64: 3, 3>, scalar_prefetch = 0 : i64, scratch_operands = 7 : i64, tpu.core_type = #tpu.core_type<tc>, window_params = [{transform_indices = @transform_0, window_bounds = array<i64: 1, 1>}, {transform_indices = @transform_1, window_bounds = array<i64: 8, 32>}, {transform_indices = @transform_2, window_bounds = array<i64: 8, 32>}, {pipeline_mode = #tpu.pipeline_mode<synchronous>, transform_indices = @transform_3, window_bounds = array<i64: 1, 128>}]} {
    %c0 = arith.constant 0 : index
    %c0_0 = arith.constant 0 : index
    %0 = memref.load %arg2[%c0, %c0_0] : memref<1x1xf32, #tpu.memory_space<smem>>
    %c0_1 = arith.constant 0 : index
    %c0_2 = arith.constant 0 : index
    %1 = vector.load %arg3[%c0_1, %c0_2] : memref<8x32xf32, #tpu.memory_space<vmem>>, vector<8x32xf32>
    %c0_3 = arith.constant 0 : index
    %c0_4 = arith.constant 0 : index
    %2 = vector.load %arg4[%c0_3, %c0_4] : memref<8x32xf32, #tpu.memory_space<vmem>>, vector<8x32xf32>
    %cst = arith.constant dense<0.000000e+00> : vector<8x8xf32>
    %3 = tpu.matmul %1, %2, %cst {dimension_numbers = #tpu.dot_dimension_numbers<[1], [1], [0], [0], [0, 0, 1, 0], [], []>} : vector<8x32xf32>, vector<8x32xf32>, vector<8x8xf32> -> vector<8x8xf32>
    %4 = vector.broadcast %0 : f32 to vector<8x8xf32>
    %5 = arith.mulf %3, %4 : vector<8x8xf32>
    %c0_i32 = arith.constant 0 : i32
    %6 = arith.cmpi eq, %arg0, %c0_i32 : i32
    %c0_i32_5 = arith.constant 0 : i32
    %7 = arith.cmpi eq, %arg1, %c0_i32_5 : i32
    %8 = arith.andi %6, %7 : i1
    %9 = arith.extui %8 : i1 to i32
    %c0_i32_6 = arith.constant 0 : i32
    %10 = arith.cmpi ne, %9, %c0_i32_6 : i32
    scf.if %10 {
      %cst_38 = arith.constant 0.000000e+00 : f32
      %73 = vector.broadcast %cst_38 : f32 to vector<8x1xf32>
      %c0_39 = arith.constant 0 : index
      %c0_40 = arith.constant 0 : index
      %74 = vector.load %arg8[%c0_39, %c0_40] : memref<8x1xf32, #tpu.memory_space<vmem>>, vector<8x1xf32>
      tpu.vector_store %arg8[%c0_39, %c0_40], %73 {strides = array<i32>} : memref<8x1xf32, #tpu.memory_space<vmem>>, vector<8x1xf32>,
      %cst_41 = arith.constant 0.000000e+00 : f32
      %75 = vector.broadcast %cst_41 : f32 to vector<1x8xf32>
      %c0_42 = arith.constant 0 : index
      %c0_43 = arith.constant 0 : index
      %76 = vector.load %arg12[%c0_42, %c0_43] : memref<1x8xf32, #tpu.memory_space<vmem>>, vector<1x8xf32>
      tpu.vector_store %arg12[%c0_42, %c0_43], %75 {strides = array<i32>} : memref<1x8xf32, #tpu.memory_space<vmem>>, vector<1x8xf32>,
      %cst_44 = arith.constant 0.000000e+00 : f32
      %77 = vector.broadcast %cst_44 : f32 to vector<8x1xf32>
      %c0_45 = arith.constant 0 : index
      %c0_46 = arith.constant 0 : index
      %78 = vector.load %arg9[%c0_45, %c0_46] : memref<8x1xf32, #tpu.memory_space<vmem>>, vector<8x1xf32>
      tpu.vector_store %arg9[%c0_45, %c0_46], %77 {strides = array<i32>} : memref<8x1xf32, #tpu.memory_space<vmem>>, vector<8x1xf32>,
    } else {
    }
    %c0_i32_7 = arith.constant 0 : i32
    %11 = arith.cmpi eq, %arg1, %c0_i32_7 : i32
    %12 = arith.extui %11 : i1 to i32
    %c0_i32_8 = arith.constant 0 : i32
    %13 = arith.cmpi ne, %12, %c0_i32_8 : i32
    scf.if %13 {
      %cst_38 = arith.constant -1.000000e+30 : f32
      %73 = vector.broadcast %cst_38 : f32 to vector<8x1xf32>
      %c0_39 = arith.constant 0 : index
      %c0_40 = arith.constant 0 : index
      %74 = vector.load %arg6[%c0_39, %c0_40] : memref<8x1xf32, #tpu.memory_space<vmem>>, vector<8x1xf32>
      tpu.vector_store %arg6[%c0_39, %c0_40], %73 {strides = array<i32>} : memref<8x1xf32, #tpu.memory_space<vmem>>, vector<8x1xf32>,
      %cst_41 = arith.constant 0.000000e+00 : f32
      %75 = vector.broadcast %cst_41 : f32 to vector<8x1xf32>
      %c0_42 = arith.constant 0 : index
      %c0_43 = arith.constant 0 : index
      %76 = vector.load %arg7[%c0_42, %c0_43] : memref<8x1xf32, #tpu.memory_space<vmem>>, vector<8x1xf32>
      tpu.vector_store %arg7[%c0_42, %c0_43], %75 {strides = array<i32>} : memref<8x1xf32, #tpu.memory_space<vmem>>, vector<8x1xf32>,
    } else {
    }
    %c0_9 = arith.constant 0 : index
    %c0_10 = arith.constant 0 : index
    %14 = vector.load %arg6[%c0_9, %c0_10] : memref<8x1xf32, #tpu.memory_space<vmem>>, vector<8x1xf32>
    %cst_11 = arith.constant dense<0xFF800000> : vector<8xf32>
    %15 = vector.multi_reduction <maximumf>, %5, %cst_11 [1] : vector<8x8xf32> to vector<8xf32>
    %16 = vector.shape_cast %15 : vector<8xf32> to vector<8x1xf32>
    %17 = arith.maximumf %14, %16 : vector<8x1xf32>
    %c0_12 = arith.constant 0 : index
    %c0_13 = arith.constant 0 : index
    %18 = vector.load %arg7[%c0_12, %c0_13] : memref<8x1xf32, #tpu.memory_space<vmem>>, vector<8x1xf32>
    %19 = arith.subf %14, %17 : vector<8x1xf32>
    %20 = math.exp %19 : vector<8x1xf32>
    %21 = arith.mulf %18, %20 : vector<8x1xf32>
    %22 = vector.broadcast %17 : vector<8x1xf32> to vector<8x8xf32>
    %23 = arith.subf %5, %22 : vector<8x8xf32>
    %24 = math.exp %23 : vector<8x8xf32>
    %cst_14 = arith.constant dense<0.000000e+00> : vector<8xf32>
    %25 = vector.multi_reduction <add>, %24, %cst_14 [1] : vector<8x8xf32> to vector<8xf32>
    %26 = vector.shape_cast %25 : vector<8xf32> to vector<8x1xf32>
    %27 = arith.addf %21, %26 : vector<8x1xf32>
    %c0_15 = arith.constant 0 : index
    %c0_16 = arith.constant 0 : index
    %28 = vector.load %arg7[%c0_15, %c0_16] : memref<8x1xf32, #tpu.memory_space<vmem>>, vector<8x1xf32>
    tpu.vector_store %arg7[%c0_15, %c0_16], %27 {strides = array<i32>} : memref<8x1xf32, #tpu.memory_space<vmem>>, vector<8x1xf32>,
    %c0_17 = arith.constant 0 : index
    %c0_18 = arith.constant 0 : index
    %29 = vector.load %arg6[%c0_17, %c0_18] : memref<8x1xf32, #tpu.memory_space<vmem>>, vector<8x1xf32>
    tpu.vector_store %arg6[%c0_17, %c0_18], %17 {strides = array<i32>} : memref<8x1xf32, #tpu.memory_space<vmem>>, vector<8x1xf32>,
    %c2_i32 = arith.constant 2 : i32
    %30 = arith.cmpi eq, %arg1, %c2_i32 : i32
    %31 = arith.extui %30 : i1 to i32
    %c0_i32_19 = arith.constant 0 : i32
    %32 = arith.cmpi ne, %31, %c0_i32_19 : i32
    scf.if %32 {
      %c0_38 = arith.constant 0 : index
      %c0_39 = arith.constant 0 : index
      %73 = vector.load %arg6[%c0_38, %c0_39] : memref<8x1xf32, #tpu.memory_space<vmem>>, vector<8x1xf32>
      %c0_40 = arith.constant 0 : index
      %c0_41 = arith.constant 0 : index
      %74 = vector.load %arg7[%c0_40, %c0_41] : memref<8x1xf32, #tpu.memory_space<vmem>>, vector<8x1xf32>
      %75 = math.log %74 : vector<8x1xf32>
      %76 = arith.addf %73, %75 : vector<8x1xf32>
      %c0_42 = arith.constant 0 : index
      %c0_43 = arith.constant 0 : index
      %77 = vector.load %arg8[%c0_42, %c0_43] : memref<8x1xf32, #tpu.memory_space<vmem>>, vector<8x1xf32>
      %78 = arith.addf %77, %76 : vector<8x1xf32>
      %c0_44 = arith.constant 0 : index
      %c0_45 = arith.constant 0 : index
      %79 = vector.load %arg8[%c0_44, %c0_45] : memref<8x1xf32, #tpu.memory_space<vmem>>, vector<8x1xf32>
      tpu.vector_store %arg8[%c0_44, %c0_45], %78 {strides = array<i32>} : memref<8x1xf32, #tpu.memory_space<vmem>>, vector<8x1xf32>,
    } else {
    }
    %c0_i32_20 = arith.constant 0 : i32
    %33 = arith.cmpi eq, %arg0, %c0_i32_20 : i32
    %34 = arith.extui %33 : i1 to i32
    %c0_i32_21 = arith.constant 0 : i32
    %35 = arith.cmpi ne, %34, %c0_i32_21 : i32
    scf.if %35 {
      %cst_38 = arith.constant -1.000000e+30 : f32
      %73 = vector.broadcast %cst_38 : f32 to vector<1x8xf32>
      %74 = arith.index_cast %arg1 : i32 to index
      %c0_39 = arith.constant 0 : index
      %c0_40 = arith.constant 0 : index
      %75 = vector.load %arg10[%74, %c0_39, %c0_40] : memref<3x1x8xf32, #tpu.memory_space<vmem>>, vector<1x1x8xf32>
      %76 = vector.shape_cast %75 : vector<1x1x8xf32> to vector<1x8xf32>
      %77 = vector.shape_cast %73 : vector<1x8xf32> to vector<1x1x8xf32>
      tpu.vector_store %arg10[%74, %c0_39, %c0_40], %77 {strides = array<i32>} : memref<3x1x8xf32, #tpu.memory_space<vmem>>, vector<1x1x8xf32>,
      %cst_41 = arith.constant 0.000000e+00 : f32
      %78 = vector.broadcast %cst_41 : f32 to vector<1x8xf32>
      %79 = arith.index_cast %arg1 : i32 to index
      %c0_42 = arith.constant 0 : index
      %c0_43 = arith.constant 0 : index
      %80 = vector.load %arg11[%79, %c0_42, %c0_43] : memref<3x1x8xf32, #tpu.memory_space<vmem>>, vector<1x1x8xf32>
      %81 = vector.shape_cast %80 : vector<1x1x8xf32> to vector<1x8xf32>
      %82 = vector.shape_cast %78 : vector<1x8xf32> to vector<1x1x8xf32>
      tpu.vector_store %arg11[%79, %c0_42, %c0_43], %82 {strides = array<i32>} : memref<3x1x8xf32, #tpu.memory_space<vmem>>, vector<1x1x8xf32>,
    } else {
    }
    %36 = arith.index_cast %arg1 : i32 to index
    %c0_22 = arith.constant 0 : index
    %c0_23 = arith.constant 0 : index
    %37 = vector.load %arg10[%36, %c0_22, %c0_23] : memref<3x1x8xf32, #tpu.memory_space<vmem>>, vector<1x1x8xf32>
    %38 = vector.shape_cast %37 : vector<1x1x8xf32> to vector<1x8xf32>
    %cst_24 = arith.constant dense<0xFF800000> : vector<8xf32>
    %39 = vector.multi_reduction <maximumf>, %5, %cst_24 [0] : vector<8x8xf32> to vector<8xf32>
    %40 = vector.shape_cast %39 : vector<8xf32> to vector<1x8xf32>
    %41 = arith.maximumf %38, %40 : vector<1x8xf32>
    %42 = arith.index_cast %arg1 : i32 to index
    %c0_25 = arith.constant 0 : index
    %c0_26 = arith.constant 0 : index
    %43 = vector.load %arg11[%42, %c0_25, %c0_26] : memref<3x1x8xf32, #tpu.memory_space<vmem>>, vector<1x1x8xf32>
    %44 = vector.shape_cast %43 : vector<1x1x8xf32> to vector<1x8xf32>
    %45 = arith.subf %38, %41 : vector<1x8xf32>
    %46 = math.exp %45 : vector<1x8xf32>
    %47 = arith.mulf %44, %46 : vector<1x8xf32>
    %48 = vector.broadcast %41 : vector<1x8xf32> to vector<8x8xf32>
    %49 = arith.subf %5, %48 : vector<8x8xf32>
    %50 = math.exp %49 : vector<8x8xf32>
    %cst_27 = arith.constant dense<0.000000e+00> : vector<8xf32>
    %51 = vector.multi_reduction <add>, %50, %cst_27 [0] : vector<8x8xf32> to vector<8xf32>
    %52 = vector.shape_cast %51 : vector<8xf32> to vector<1x8xf32>
    %53 = arith.addf %47, %52 : vector<1x8xf32>
    %54 = arith.index_cast %arg1 : i32 to index
    %c0_28 = arith.constant 0 : index
    %c0_29 = arith.constant 0 : index
    %55 = vector.load %arg11[%54, %c0_28, %c0_29] : memref<3x1x8xf32, #tpu.memory_space<vmem>>, vector<1x1x8xf32>
    %56 = vector.shape_cast %55 : vector<1x1x8xf32> to vector<1x8xf32>
    %57 = vector.shape_cast %53 : vector<1x8xf32> to vector<1x1x8xf32>
    tpu.vector_store %arg11[%54, %c0_28, %c0_29], %57 {strides = array<i32>} : memref<3x1x8xf32, #tpu.memory_space<vmem>>, vector<1x1x8xf32>,
    %58 = arith.index_cast %arg1 : i32 to index
    %c0_30 = arith.constant 0 : index
    %c0_31 = arith.constant 0 : index
    %59 = vector.load %arg10[%58, %c0_30, %c0_31] : memref<3x1x8xf32, #tpu.memory_space<vmem>>, vector<1x1x8xf32>
    %60 = vector.shape_cast %59 : vector<1x1x8xf32> to vector<1x8xf32>
    %61 = vector.shape_cast %41 : vector<1x8xf32> to vector<1x1x8xf32>
    tpu.vector_store %arg10[%58, %c0_30, %c0_31], %61 {strides = array<i32>} : memref<3x1x8xf32, #tpu.memory_space<vmem>>, vector<1x1x8xf32>,
    %c2_i32_32 = arith.constant 2 : i32
    %62 = arith.cmpi eq, %arg0, %c2_i32_32 : i32
    %63 = arith.extui %62 : i1 to i32
    %c0_i32_33 = arith.constant 0 : i32
    %64 = arith.cmpi ne, %63, %c0_i32_33 : i32
    scf.if %64 {
      %73 = arith.index_cast %arg1 : i32 to index
      %c0_38 = arith.constant 0 : index
      %c0_39 = arith.constant 0 : index
      %74 = vector.load %arg10[%73, %c0_38, %c0_39] : memref<3x1x8xf32, #tpu.memory_space<vmem>>, vector<1x1x8xf32>
      %75 = vector.shape_cast %74 : vector<1x1x8xf32> to vector<1x8xf32>
      %76 = arith.index_cast %arg1 : i32 to index
      %c0_40 = arith.constant 0 : index
      %c0_41 = arith.constant 0 : index
      %77 = vector.load %arg11[%76, %c0_40, %c0_41] : memref<3x1x8xf32, #tpu.memory_space<vmem>>, vector<1x1x8xf32>
      %78 = vector.shape_cast %77 : vector<1x1x8xf32> to vector<1x8xf32>
      %79 = math.log %78 : vector<1x8xf32>
      %80 = arith.addf %75, %79 : vector<1x8xf32>
      %c0_42 = arith.constant 0 : index
      %c0_43 = arith.constant 0 : index
      %81 = vector.load %arg12[%c0_42, %c0_43] : memref<1x8xf32, #tpu.memory_space<vmem>>, vector<1x8xf32>
      %82 = arith.addf %81, %80 : vector<1x8xf32>
      %c0_44 = arith.constant 0 : index
      %c0_45 = arith.constant 0 : index
      %83 = vector.load %arg12[%c0_44, %c0_45] : memref<1x8xf32, #tpu.memory_space<vmem>>, vector<1x8xf32>
      tpu.vector_store %arg12[%c0_44, %c0_45], %82 {strides = array<i32>} : memref<1x8xf32, #tpu.memory_space<vmem>>, vector<1x8xf32>,
    } else {
    }
    %65 = arith.cmpi eq, %arg0, %arg1 : i32
    %66 = arith.extui %65 : i1 to i32
    %c0_i32_34 = arith.constant 0 : i32
    %67 = arith.cmpi ne, %66, %c0_i32_34 : i32
    scf.if %67 {
      %c0_38 = arith.constant 0 : index
      %c0_39 = arith.constant 0 : index
      %73 = vector.load %arg9[%c0_38, %c0_39] : memref<8x1xf32, #tpu.memory_space<vmem>>, vector<8x1xf32>
      %74 = arith.mulf %1, %2 : vector<8x32xf32>
      %cst_40 = arith.constant dense<0.000000e+00> : vector<8xf32>
      %75 = vector.multi_reduction <add>, %74, %cst_40 [1] : vector<8x32xf32> to vector<8xf32>
      %76 = vector.shape_cast %75 : vector<8xf32> to vector<8x1xf32>
      %77 = arith.addf %73, %76 : vector<8x1xf32>
      %c0_41 = arith.constant 0 : index
      %c0_42 = arith.constant 0 : index
      %78 = vector.load %arg9[%c0_41, %c0_42] : memref<8x1xf32, #tpu.memory_space<vmem>>, vector<8x1xf32>
      tpu.vector_store %arg9[%c0_41, %c0_42], %77 {strides = array<i32>} : memref<8x1xf32, #tpu.memory_space<vmem>>, vector<8x1xf32>,
    } else {
    }
    %c2_i32_35 = arith.constant 2 : i32
    %68 = arith.cmpi eq, %arg0, %c2_i32_35 : i32
    %c2_i32_36 = arith.constant 2 : i32
    %69 = arith.cmpi eq, %arg1, %c2_i32_36 : i32
    %70 = arith.andi %68, %69 : i1
    %71 = arith.extui %70 : i1 to i32
    %c0_i32_37 = arith.constant 0 : i32
    %72 = arith.cmpi ne, %71, %c0_i32_37 : i32
    scf.if %72 {
      %c0_38 = arith.constant 0 : index
      %c0_39 = arith.constant 0 : index
      %73 = vector.load %arg8[%c0_38, %c0_39] : memref<8x1xf32, #tpu.memory_space<vmem>>, vector<8x1xf32>
      %74 = vector.shape_cast %73 : vector<8x1xf32> to vector<1x8x1xf32>
      %cst_40 = arith.constant dense<0.000000e+00> : vector<1xf32>
      %75 = vector.multi_reduction <add>, %74, %cst_40 [1, 2] : vector<1x8x1xf32> to vector<1xf32>
      %76 = vector.shape_cast %75 : vector<1xf32> to vector<1x1x1xf32>
      %77 = vector.extract %76[0, 0, 0] : f32 from vector<1x1x1xf32>
      %c0_41 = arith.constant 0 : index
      %c0_42 = arith.constant 0 : index
      %78 = vector.load %arg12[%c0_41, %c0_42] : memref<1x8xf32, #tpu.memory_space<vmem>>, vector<1x8xf32>
      %79 = vector.shape_cast %78 : vector<1x8xf32> to vector<1x1x8xf32>
      %cst_43 = arith.constant dense<0.000000e+00> : vector<1xf32>
      %80 = vector.multi_reduction <add>, %79, %cst_43 [1, 2] : vector<1x1x8xf32> to vector<1xf32>
      %81 = vector.shape_cast %80 : vector<1xf32> to vector<1x1x1xf32>
      %82 = vector.extract %81[0, 0, 0] : f32 from vector<1x1x1xf32>
      %c0_44 = arith.constant 0 : index
      %c0_45 = arith.constant 0 : index
      %83 = vector.load %arg9[%c0_44, %c0_45] : memref<8x1xf32, #tpu.memory_space<vmem>>, vector<8x1xf32>
      %84 = vector.shape_cast %83 : vector<8x1xf32> to vector<1x8x1xf32>
      %cst_46 = arith.constant dense<0.000000e+00> : vector<1xf32>
      %85 = vector.multi_reduction <add>, %84, %cst_46 [1, 2] : vector<1x8x1xf32> to vector<1xf32>
      %86 = vector.shape_cast %85 : vector<1xf32> to vector<1x1x1xf32>
      %87 = vector.extract %86[0, 0, 0] : f32 from vector<1x1x1xf32>
      %88 = arith.mulf %0, %87 : f32
      %89 = arith.addf %77, %82 : f32
      %cst_47 = arith.constant 2.000000e+00 : f32
      %90 = arith.mulf %cst_47, %88 : f32
      %91 = arith.subf %89, %90 : f32
      %cst_48 = arith.constant 4.800000e+01 : f32
      %92 = arith.divf %91, %cst_48 : f32
      %93 = vector.broadcast %92 : f32 to vector<1x128xf32>
      %c0_49 = arith.constant 0 : index
      %c0_50 = arith.constant 0 : index
      %94 = vector.load %arg5[%c0_49, %c0_50] : memref<1x128xf32, #tpu.memory_space<vmem>>, vector<1x128xf32>
      tpu.vector_store %arg5[%c0_49, %c0_50], %93 {strides = array<i32>} : memref<1x128xf32, #tpu.memory_space<vmem>>, vector<1x128xf32>,
    } else {
    }
    return
  }
  func.func @transform_0(%arg0: i32, %arg1: i32) -> (i32, i32) {
    %c0_i32 = arith.constant 0 : i32
    %c0_i32_0 = arith.constant 0 : i32
    %c0_i32_1 = arith.constant 0 : i32
    return %c0_i32, %c0_i32_0 : i32, i32
  }
  func.func @transform_1(%arg0: i32, %arg1: i32) -> (i32, i32) {
    %c0_i32 = arith.constant 0 : i32
    %c0_i32_0 = arith.constant 0 : i32
    return %arg0, %c0_i32 : i32, i32
  }
  func.func @transform_2(%arg0: i32, %arg1: i32) -> (i32, i32) {
    %c0_i32 = arith.constant 0 : i32
    %c0_i32_0 = arith.constant 0 : i32
    return %arg1, %c0_i32 : i32, i32
  }
  func.func @transform_3(%arg0: i32, %arg1: i32) -> (i32, i32) {
    %c0_i32 = arith.constant 0 : i32
    %c0_i32_0 = arith.constant 0 : i32
    %c0_i32_1 = arith.constant 0 : i32
    return %c0_i32, %c0_i32_0 : i32, i32
  }
}

</mosaic_0001>

<llo_original>
// kernel: tpu_custom_call.1
$region0: #{tpu_custom_call.1}
  #allocation0 [shape = 'u32[]', space=smem, size = 0x4, offset = 0x4, fixed_abs, tag = 'smem constant byte address 0x4 - core index']
  #allocation1 [shape = 'u32[144,128]{1,0:T(1,128)}', space=vmem, size = 0x12000, scoped, tag = 'internal scratch']
  #allocation2 [shape = 'f32[8,1]{1,0:T(8,128)}', space=vmem, size = 0x1000, scoped, tag = 'scratch operand']
  #allocation3 [shape = 'f32[8,1]{1,0:T(8,128)}', space=vmem, size = 0x1000, scoped, tag = 'scratch operand']
  #allocation4 [shape = 'f32[8,1]{1,0:T(8,128)}', space=vmem, size = 0x1000, scoped, tag = 'scratch operand']
  #allocation5 [shape = 'f32[8,1]{1,0:T(8,128)}', space=vmem, size = 0x1000, scoped, tag = 'scratch operand']
  #allocation6 [shape = 'f32[3,1,8]{2,1,0:T(1,128)}', space=vmem, size = 0x600, scoped, tag = 'scratch operand']
  #allocation7 [shape = 'f32[3,1,8]{2,1,0:T(1,128)}', space=vmem, size = 0x600, scoped, tag = 'scratch operand']
  #allocation8 [shape = 'f32[1,8]{1,0:T(1,128)}', space=vmem, size = 0x200, scoped, tag = 'scratch operand']
  #allocation9 [shape = 'f32[1,1]{1,0:T(1,128)S(6)}', space=smem, size = 0x200, scoped, tag = 'scoped memory for tpu_custom_call.1']
  %s0 = inlined_call_operand.<no memory space> [shape: f32[1,1], index: 0, kind: input, shape index: {}]
  %s1 = inlined_call_operand.hbm [shape: f32[24,32], index: 1, kind: input, shape index: {}]
  %s2 = inlined_call_operand.hbm [shape: f32[24,32], index: 2, kind: input, shape index: {}]
  %s3 = inlined_call_operand.hbm [shape: f32[1,128], index: 3, kind: output, shape index: {}]
  %s4 = sld [smem:[#allocation0]]
  $region81: #{tpu_custom_call.1} parent=0
    _
  %s6 = ssub.s32 1, %s4
  %s7 = scalar_select 0, %s6, %s4
  %8 = sst [smem:[#allocation9]] %s0
  $region1: #{tpu_custom_call.1} parent=0
    #allocation10 [shape = 'u8[8192]{0}', space=vmem, size = 0x2000, scoped, tag = 'input window, operand 1']
    #allocation11 [shape = 's32[2]{0}', space=sflag, size = 0x8, scoped, tag = 'scoped memory for tpu_custom_call.1']
    #allocation12 [shape = 's32[2]{0}', space=sflag, size = 0x8, scoped, tag = 'scoped memory for tpu_custom_call.1']
    #allocation13 [shape = 'u8[8192]{0}', space=vmem, size = 0x2000, scoped, tag = 'input window, operand 2']
    #allocation14 [shape = 's32[2]{0}', space=sflag, size = 0x8, scoped, tag = 'scoped memory for tpu_custom_call.1']
    #allocation15 [shape = 'u8[512]{0}', space=vmem, size = 0x400, scoped, tag = 'output window, operand 0, single buffered']
    %9 = vsyncpa [#allocation11], 0
    %s10 = scalar_lea.sflag [#allocation11], 1
    %11 = vsyncpa %s10, 0
    %12 = vsyncpa [#allocation14], 0
    %s13 = scalar_lea.sflag [#allocation14], 1
    %14 = vsyncpa %s13, 0
    %15 = vsyncpa [#allocation12], 0
    loop: start=0, step=1, limit=11
    $region2: #{tpu_custom_call.1} parent=1 // loop_pre_header
      _
    $region3: #{tpu_custom_call.1} parent=1 // loop_header
      %s17 = sphi 0, %s21
      %p18 = scmp.ge.s32.totalorder %s17, 11
      %s24 = sphi 0, %s36
      %s25 = sphi 0, %s32
      %s26 = sphi 0, %s24
      %s27 = sphi 0, %s25
      %s28 = sphi 0, %s26
      %s29 = sphi 0, %s27
      %s37 = sphi 0, %s37
      %s39 = sphi 0, %s37
      %s40 = sphi 0, %s39
      %s54 = sphi 0, %s40
      %s60 = sphi 0, %s62
      %s63 = sphi 0, %s60
      %s64 = sphi 0, %s63
      %s80 = sphi 0, %s64
      %s86 = sphi 0, %s88
      %s89 = sphi 0, %s86
      %s90 = sphi 0, %s89
      %s106 = sphi 0, %s90
      %s110 = sphi 0, %s110
      %s112 = sphi 0, %s110
      %s113 = sphi 0, %s112
      %s127 = sphi 0, %s113
    $region4: #{tpu_custom_call.1} parent=1 // loop_header_branch
      %20 = sbr.rel (%p18) target = $region8
    $region5: #{tpu_custom_call.1} parent=1 // loop_body
      %s22 = ssub.s32 %s17, 1
      %s23 = ssub.s32 %s17, 2
      %s30 = sadd.s32 1, %s25
      %p31 = scmp.ge.s32.totalorder %s30, 3
      %s32 = scalar_select %p31, 0, %s30
      %s33 = sadd.s32 1, %s24
      %s34 = scalar_select %p31, %s33, %s24
      %p35 = scmp.ge.s32.totalorder %s34, 3
      %s36 = scalar_select %p35, 0, %s34
      %s38 = sadd.s32 %s37, 1
      %p41 = scmp.eq.s32.totalorder %s17, 8
      %p42 = scmp.ne.s32.totalorder %s37, %s39
      %p43 = scmp.eq.s32.totalorder %s17, 0
      %p44 = por %p42, %p43
      %p45 = scmp.ne.s32.totalorder %s37, %s39
      %p46 = scmp.eq.s32.totalorder %s22, 8
      %p47 = por %p45, %p46
      %p48 = scmp.ne.s32.totalorder %s39, %s40
      %p49 = scmp.eq.s32.totalorder %s22, 0
      %p50 = por %p48, %p49
      %p51 = scmp.ne.s32.totalorder %s39, %s40
      %p52 = scmp.eq.s32.totalorder %s23, 8
      %p53 = por %p51, %p52
      %p55 = scmp.ne.s32.totalorder %s40, %s54
      %p56 = scmp.eq.s32.totalorder %s23, 0
      %p57 = por %p55, %p56
      %s58 = ssub.s32 %s24, %s36
      %p59 = scmp.eq.s32.totalorder %s58, 0
      %s61 = sadd.s32 %s60, 1
      %s62 = scalar_select %p59, %s60, %s61
      %p65 = pneg %p59
      %p66 = scmp.eq.s32.totalorder %s17, 8
      %p67 = por %p65, %p66
      %p68 = scmp.ne.s32.totalorder %s60, %s63
      %p69 = scmp.eq.s32.totalorder %s17, 0
      %p70 = por %p68, %p69
      %p71 = scmp.ne.s32.totalorder %s60, %s63
      %p72 = scmp.eq.s32.totalorder %s22, 8
      %p73 = por %p71, %p72
      %p74 = scmp.ne.s32.totalorder %s63, %s64
      %p75 = scmp.eq.s32.totalorder %s22, 0
      %p76 = por %p74, %p75
      %p77 = scmp.ne.s32.totalorder %s63, %s64
      %p78 = scmp.eq.s32.totalorder %s23, 8
      %p79 = por %p77, %p78
      %p81 = scmp.ne.s32.totalorder %s64, %s80
      %p82 = scmp.eq.s32.totalorder %s23, 0
      %p83 = por %p81, %p82
      %s84 = ssub.s32 %s25, %s32
      %p85 = scmp.eq.s32.totalorder %s84, 0
      %s87 = sadd.s32 %s86, 1
      %s88 = scalar_select %p85, %s86, %s87
      %p91 = pneg %p85
      %p92 = scmp.eq.s32.totalorder %s17, 8
      %p93 = por %p91, %p92
      %p94 = scmp.ne.s32.totalorder %s86, %s89
      %p95 = scmp.eq.s32.totalorder %s17, 0
      %p96 = por %p94, %p95
      %p97 = scmp.ne.s32.totalorder %s86, %s89
      %p98 = scmp.eq.s32.totalorder %s22, 8
      %p99 = por %p97, %p98
      %p100 = scmp.ne.s32.totalorder %s89, %s90
      %p101 = scmp.eq.s32.totalorder %s22, 0
      %p102 = por %p100, %p101
      %p103 = scmp.ne.s32.totalorder %s89, %s90
      %p104 = scmp.eq.s32.totalorder %s23, 8
      %p105 = por %p103, %p104
      %p107 = scmp.ne.s32.totalorder %s90, %s106
      %p108 = scmp.eq.s32.totalorder %s23, 0
      %p109 = por %p107, %p108
      %s111 = sadd.s32 %s110, 1
      %p114 = scmp.eq.s32.totalorder %s17, 8
      %p115 = scmp.ne.s32.totalorder %s110, %s112
      %p116 = scmp.eq.s32.totalorder %s17, 0
      %p117 = por %p115, %p116
      %p118 = scmp.ne.s32.totalorder %s110, %s112
      %p119 = scmp.eq.s32.totalorder %s22, 8
      %p120 = por %p118, %p119
      %p121 = scmp.ne.s32.totalorder %s112, %s113
      %p122 = scmp.eq.s32.totalorder %s22, 0
      %p123 = por %p121, %p122
      %p124 = scmp.ne.s32.totalorder %s112, %s113
      %p125 = scmp.eq.s32.totalorder %s23, 8
      %p126 = por %p124, %p125
      %p128 = scmp.ne.s32.totalorder %s113, %s127
      %p129 = scmp.eq.s32.totalorder %s23, 0
      %p130 = por %p128, %p129
      %p131 = scmp.le.s32.totalorder 1, %s17
      %p132 = scmp.lt.s32.totalorder %s17, 10
      %p133 = pnand %p131, %p132
      %p134 = pneg %p133
      // Predicated region
      $region9: #{tpu_custom_call.1} parent=5 // pred_check
        _
      $region10: #{tpu_custom_call.1} parent=5 // pred_check_branch
        %136 = sbr.rel (%p133) target = $region12
      $region11: #{tpu_custom_call.1} parent=5 // pred_region
        %s137 = ssub.s32 %s17, 1
        // Predicated region
        $region13: #{tpu_custom_call.1} parent=11 // pred_check
          %p138 = pneg %p50
        $region14: #{tpu_custom_call.1} parent=11 // pred_check_branch
          %140 = sbr.rel (%p138) target = $region16
        $region15: #{tpu_custom_call.1} parent=11 // pred_region
          _
        $region16: #{tpu_custom_call.1} parent=11 // pred_fallthru
          _
      $region12: #{tpu_custom_call.1} parent=5 // pred_fallthru
        _
      %p141 = scmp.lt.s32.totalorder %s17, 9
      // Predicated region
      $region17: #{tpu_custom_call.1} parent=5 // pred_check
        %p142 = pneg %p141
      $region18: #{tpu_custom_call.1} parent=5 // pred_check_branch
        %144 = sbr.rel (%p142) target = $region20
      $region19: #{tpu_custom_call.1} parent=5 // pred_region
        // Predicated region
        $region21: #{tpu_custom_call.1} parent=19 // pred_check
          %p145 = pneg %p70
        $region22: #{tpu_custom_call.1} parent=19 // pred_check_branch
          %147 = sbr.rel (%p145) target = $region24
        $region23: #{tpu_custom_call.1} parent=19 // pred_region
          %s148 = sand.u32 %s60, 1
          %s149 = scalar_lea.sflag [#allocation11], %s148
          %s150 = sand.u32 %s60, 1
          %s151 = smul.addr %s150, 8
          %s152 = scalar_lea.vmem [#allocation10], %s151
          %s154 = ssub.s32 128, 128
          %155 = vsyncadd %s149, %s154
          %s156 = smul.addr %s24, 128
          %s157 = scalar_lea.hbm %s1, %s156
          %s159 = sshll.u32 %s152, 4
          %s160 = int_to_ptr.vmem [resolvable:$true] %s159
          %162 = dma.hbm_to_vmem [thread:$0]  %s157, 128, %s160, %s149
        $region24: #{tpu_custom_call.1} parent=19 // pred_fallthru
          _
        // Predicated region
        $region25: #{tpu_custom_call.1} parent=19 // pred_check
          %p163 = pneg %p96
        $region26: #{tpu_custom_call.1} parent=19 // pred_check_branch
          %165 = sbr.rel (%p163) target = $region28
        $region27: #{tpu_custom_call.1} parent=19 // pred_region
          %s166 = sand.u32 %s86, 1
          %s167 = scalar_lea.sflag [#allocation14], %s166
          %s168 = sand.u32 %s86, 1
          %s169 = smul.addr %s168, 8
          %s170 = scalar_lea.vmem [#allocation13], %s169
          %s172 = ssub.s32 128, 128
          %173 = vsyncadd %s167, %s172
          %s174 = smul.addr %s25, 128
          %s175 = scalar_lea.hbm %s2, %s174
          %s177 = sshll.u32 %s170, 4
          %s178 = int_to_ptr.vmem [resolvable:$true] %s177
          %180 = dma.hbm_to_vmem [thread:$0]  %s175, 128, %s178, %s167
        $region28: #{tpu_custom_call.1} parent=19 // pred_fallthru
          _
      $region20: #{tpu_custom_call.1} parent=5 // pred_fallthru
        _
      %p181 = scmp.le.s32.totalorder 1, %s17
      %p182 = scmp.lt.s32.totalorder %s17, 10
      %p183 = pnand %p181, %p182
      %p184 = pneg %p183
      // Predicated region
      $region29: #{tpu_custom_call.1} parent=5 // pred_check
        _
      $region30: #{tpu_custom_call.1} parent=5 // pred_check_branch
        %186 = sbr.rel (%p183) target = $region32
      $region31: #{tpu_custom_call.1} parent=5 // pred_region
        %s187 = ssub.s32 %s17, 1
        %s188 = sand.u32 %s63, 1
        %s189 = scalar_lea.sflag [#allocation11], %s188
        %s190 = sand.u32 %s63, 1
        %s191 = smul.addr %s190, 8
        %s192 = scalar_lea.vmem [#allocation10], %s191
        // Predicated region
        $region33: #{tpu_custom_call.1} parent=31 // pred_check
          %p193 = pneg %p76
        $region34: #{tpu_custom_call.1} parent=31 // pred_check_branch
          %195 = sbr.rel (%p193) target = $region36
        $region35: #{tpu_custom_call.1} parent=31 // pred_region
          %196 = dma.done %s189, 128
        $region36: #{tpu_custom_call.1} parent=31 // pred_fallthru
          _
        %s197 = sand.u32 %s89, 1
        %s198 = scalar_lea.sflag [#allocation14], %s197
        %s199 = sand.u32 %s89, 1
        %s200 = smul.addr %s199, 8
        %s201 = scalar_lea.vmem [#allocation13], %s200
        // Predicated region
        $region37: #{tpu_custom_call.1} parent=31 // pred_check
          %p202 = pneg %p102
        $region38: #{tpu_custom_call.1} parent=31 // pred_check_branch
          %204 = sbr.rel (%p202) target = $region40
        $region39: #{tpu_custom_call.1} parent=31 // pred_region
          %205 = dma.done %s198, 128
        $region40: #{tpu_custom_call.1} parent=31 // pred_fallthru
          _
        %p206 = pneg %p50
        %p207 = pneg %p47
        %s208 = sand.u32 %s63, 1
        %s209 = scalar_lea.sflag [#allocation11], %s208
        %s210 = sand.u32 %s63, 1
        %s211 = smul.addr %s210, 8
        %s212 = scalar_lea.vmem [#allocation10], %s211
        %p213 = pneg %p76
        %p214 = pneg %p73
        %s215 = sand.u32 %s89, 1
        %s216 = scalar_lea.sflag [#allocation14], %s215
        %s217 = sand.u32 %s89, 1
        %s218 = smul.addr %s217, 8
        %s219 = scalar_lea.vmem [#allocation13], %s218
        %p220 = pneg %p102
        %p221 = pneg %p99
        %p222 = pneg %p123
        %p223 = pneg %p120
        %s224 = sld [smem:[#allocation9]]
        %v225 = vld [vmem:[%s192] sm:$0xff]
        %v226 = vld [vmem:[%s201] sm:$0xff]
        %vm227 = vcmask 261120
        %v229 = vsel %vm227, %v225, 0
        %v232 = vsel %vm227, %v226, 0
        %234 = vmatprep.subr.mxu0 0.0
        %235 = vmatpush1.xpose.msra.mxu0 0.0
        %236 = vmatprep.subr.mxu0 0.0
        %237 = vmatpush1.xpose.msra.mxu0 0.0
        %238 = vmatprep.subr.mxu0 0.0
        %239 = vmatpush1.xpose.msra.mxu0 0.0
        %240 = vmatprep.subr.mxu0 0.0
        %241 = vmatpush1.xpose.msra.mxu0 0.0
        %242 = vmatprep.subr.mxu0 0.0
        %243 = vmatpush1.xpose.msra.mxu0 0.0
        %244 = vmatprep.subr.mxu0 0.0
        %245 = vmatpush1.xpose.msra.mxu0 0.0
        %246 = vmatprep.subr.mxu0 0.0
        %247 = vmatpush1.xpose.msra.mxu0 0.0
        %248 = vmatprep.subr.mxu0 0.0
        %249 = vmatpush1.xpose.msra.mxu0 0.0
        %250 = vmatprep.subr.mxu0 0.0
        %251 = vmatpush1.xpose.msra.mxu0 0.0
        %252 = vmatprep.subr.mxu0 0.0
        %253 = vmatpush1.xpose.msra.mxu0 0.0
        %254 = vmatprep.subr.mxu0 0.0
        %255 = vmatpush1.xpose.msra.mxu0 0.0
        %256 = vmatprep.subr.mxu0 0.0
        %257 = vmatpush1.xpose.msra.mxu0 0.0
        %258 = vmatprep.subr.mxu0 0.0
        %259 = vmatpush1.xpose.msra.mxu0 0.0
        %260 = vmatprep.subr.mxu0 0.0
        %261 = vmatpush1.xpose.msra.mxu0 0.0
        %262 = vmatprep.subr.mxu0 0.0
        %263 = vmatpush1.xpose.msra.mxu0 0.0
        %264 = vmatprep.subr.mxu0 0.0
        %265 = vmatpush1.xpose.msra.mxu0 %v232
        %266 = vmatprep.subr.mxu0 0.0
        %267 = vmatpush2.xpose.msra.mxu0 0.0
        %268 = vmatprep.subr.mxu0 0.0
        %269 = vmatpush2.xpose.msra.mxu0 0.0
        %270 = vmatprep.subr.mxu0 0.0
        %271 = vmatpush2.xpose.msra.mxu0 0.0
        %272 = vmatprep.subr.mxu0 0.0
        %273 = vmatpush2.xpose.msra.mxu0 0.0
        %274 = vmatprep.subr.mxu0 0.0
        %275 = vmatpush2.xpose.msra.mxu0 0.0
        %276 = vmatprep.subr.mxu0 0.0
        %277 = vmatpush2.xpose.msra.mxu0 0.0
        %278 = vmatprep.subr.mxu0 0.0
        %279 = vmatpush2.xpose.msra.mxu0 0.0
        %280 = vmatprep.subr.mxu0 0.0
        %281 = vmatpush2.xpose.msra.mxu0 0.0
        %282 = vmatprep.subr.mxu0 0.0
        %283 = vmatpush2.xpose.msra.mxu0 0.0
        %284 = vmatprep.subr.mxu0 0.0
        %285 = vmatpush2.xpose.msra.mxu0 0.0
        %286 = vmatprep.subr.mxu0 0.0
        %287 = vmatpush2.xpose.msra.mxu0 0.0
        %288 = vmatprep.subr.mxu0 0.0
        %289 = vmatpush2.xpose.msra.mxu0 0.0
        %290 = vmatprep.subr.mxu0 0.0
        %291 = vmatpush2.xpose.msra.mxu0 0.0
        %292 = vmatprep.subr.mxu0 0.0
        %293 = vmatpush2.xpose.msra.mxu0 0.0
        %294 = vmatprep.subr.mxu0 0.0
        %295 = vmatpush2.xpose.msra.mxu0 0.0
        %296 = vmatprep.subr.mxu0 0.0
        %297 = vmatpush2.xpose.msra.mxu0 0.0
        %298 = vmatprep.mubr.f32.mxu0 0.0
        %299 = vmatmul.mubr.f32.gmra.mxu0 %v229
        %v300 = vpop.f32.mrf.mxu0
        %v301 = vadd.f32 0.0, %v300
        %v302 = vpop.f32.mrf.mxu0
        %303 = vdwg.mxu0
        %v304 = vstv %s224
        %v305 = vmul.f32 %v301, %v304
        %p306 = scmp.eq.s32.totalorder %s26, 0
        %p307 = scmp.eq.s32.totalorder %s27, 0
        %p308 = pnand %p306, %p307
        %p309 = pneg %p308
        // Predicated region
        $region41: #{tpu_custom_call.1} parent=31 // pred_check
          _
        $region42: #{tpu_custom_call.1} parent=31 // pred_check_branch
          %311 = sbr.rel (%p308) target = $region44
        $region43: #{tpu_custom_call.1} parent=31 // pred_region
          %vm312 = vcmask 7168
          %313 = vst.msk [vmem:[#allocation4] sm:$0xff] %vm312, 0.0
          %vm314 = vcmask 57344
          %315 = vst.msk [vmem:[#allocation8] sm:$0x1] %vm314, 0.0
          %316 = vst.msk [vmem:[#allocation5] sm:$0xff] %vm312, 0.0
        $region44: #{tpu_custom_call.1} parent=31 // pred_fallthru
          _
        // Predicated region
        $region45: #{tpu_custom_call.1} parent=31 // pred_check
          %p317 = pneg %p307
        $region46: #{tpu_custom_call.1} parent=31 // pred_check_branch
          %319 = sbr.rel (%p317) target = $region48
        $region47: #{tpu_custom_call.1} parent=31 // pred_region
          %vm320 = vcmask 7168
          %321 = vst.msk [vmem:[#allocation2] sm:$0xff] %vm320, -1e+30
          %322 = vst.msk [vmem:[#allocation3] sm:$0xff] %vm320, 0.0
        $region48: #{tpu_custom_call.1} parent=31 // pred_fallthru
          _
        %v323 = vld [vmem:[#allocation2] sm:$0xff]
        %vm324 = vcmask 64512
        %v325 = vsel %vm324, %v305, -inf
        %326 = vmax.xlane.f32.xlu0 %v325
        %v327 = vpop.xlane.xlu0 %326
        %v328 = vmax.f32 %v323, %v327
        %v329 = vld [vmem:[#allocation3] sm:$0xff]
        %v330 = vsub.f32 %v323, %v328
        %v331 = vmul.f32 %v330, 1.442695
        %v332 = vpow.pop %v331
        %v333 = vmul.f32 %v329, %v332
        %335 = vset.pattern.permute.xlu0 0
        %336 = vperm.xlu0 %335, %v328
        %v337 = vpop.permute.xlu0 %336
        %v339 = vsub.f32 %v305, %v337
        %v340 = vmul.f32 %v339, 1.442695
        %v341 = vpow.pop %v340
        %v342 = vsel %vm324, %v341, 0.0
        %343 = vadd.xlane.f32.xlu0 %v342
        %v344 = vpop.xlane.xlu0 %343
        %v345 = vadd.f32 %v333, %v344
        %vm346 = vcmask 7168
        %347 = vst.msk [vmem:[#allocation3] sm:$0xff] %vm346, %v345
        %348 = vst.msk [vmem:[#allocation2] sm:$0xff] %vm346, %v328
        %p349 = scmp.eq.s32.totalorder %s27, 2
        // Predicated region
        $region49: #{tpu_custom_call.1} parent=31 // pred_check
          %p350 = pneg %p349
        $region50: #{tpu_custom_call.1} parent=31 // pred_check_branch
          %352 = sbr.rel (%p350) target = $region52
        $region51: #{tpu_custom_call.1} parent=31 // pred_region
          %v353 = vld [vmem:[#allocation2] sm:$0xff]
          %v354 = vld [vmem:[#allocation3] sm:$0xff]
          %v355 = vlog2.pop %v354
          %v356 = vmul.f32 %v355, 0.6931472
          %v357 = vadd.f32 %v353, %v356
          %v358 = vld [vmem:[#allocation4] sm:$0xff]
          %v359 = vadd.f32 %v358, %v357
          %360 = vst.msk [vmem:[#allocation4] sm:$0xff] %vm346, %v359
        $region52: #{tpu_custom_call.1} parent=31 // pred_fallthru
          _
        // Predicated region
        $region53: #{tpu_custom_call.1} parent=31 // pred_check
          %p361 = pneg %p306
        $region54: #{tpu_custom_call.1} parent=31 // pred_check_branch
          %363 = sbr.rel (%p361) target = $region56
        $region55: #{tpu_custom_call.1} parent=31 // pred_region
          %s364 = scalar_lea.vmem [#allocation6], %s27
          %vm365 = vcmask 57344
          %366 = vst.msk [vmem:[%s364] sm:$0x1] %vm365, -1e+30
          %s367 = scalar_lea.vmem [#allocation7], %s27
          %368 = vst.msk [vmem:[%s367] sm:$0x1] %vm365, 0.0
        $region56: #{tpu_custom_call.1} parent=31 // pred_fallthru
          _
        %s369 = scalar_lea.vmem [#allocation6], %s27
        %v370 = vld [vmem:[%s369] sm:$0x1]
        %v371 = vrot.slane %v325, 4
        %v372 = vmax.f32 %v325, %v371
        %v373 = vrot.slane %v372, 2
        %v374 = vmax.f32 %v372, %v373
        %v375 = vrot.slane %v374, 1
        %v376 = vmax.f32 %v374, %v375
        %v377 = vmax.f32 %v370, %v376
        %s378 = scalar_lea.vmem [#allocation7], %s27
        %v379 = vld [vmem:[%s378] sm:$0x1]
        %v380 = vsub.f32 %v370, %v377
        %v381 = vmul.f32 %v380, 1.442695
        %v382 = vpow.pop %v381
        %v383 = vmul.f32 %v379, %v382
        %v385 = vlaneseq
        %v386 = vshrl.u32 %v385, 7
        %v387 = vsub.s32 0, %v386
        %v388 = vrot.slane %v377, %v387
        %v390 = vsub.f32 %v305, %v388
        %v391 = vmul.f32 %v390, 1.442695
        %v392 = vpow.pop %v391
        %v393 = vsel %vm324, %v392, 0.0
        %v394 = vrot.slane %v393, 4
        %v395 = vadd.f32 %v393, %v394
        %v396 = vrot.slane %v395, 2
        %v397 = vadd.f32 %v395, %v396
        %v398 = vrot.slane %v397, 1
        %v399 = vadd.f32 %v397, %v398
        %v400 = vadd.f32 %v383, %v399
        %vm401 = vcmask 57344
        %402 = vst.msk [vmem:[%s378] sm:$0x1] %vm401, %v400
        %403 = vst.msk [vmem:[%s369] sm:$0x1] %vm401, %v377
        %p404 = scmp.eq.s32.totalorder %s26, 2
        // Predicated region
        $region57: #{tpu_custom_call.1} parent=31 // pred_check
          %p405 = pneg %p404
        $region58: #{tpu_custom_call.1} parent=31 // pred_check_branch
          %407 = sbr.rel (%p405) target = $region60
        $region59: #{tpu_custom_call.1} parent=31 // pred_region
          %v408 = vld [vmem:[%s369] sm:$0x1]
          %v409 = vld [vmem:[%s378] sm:$0x1]
          %v410 = vlog2.pop %v409
          %v411 = vmul.f32 %v410, 0.6931472
          %v412 = vadd.f32 %v408, %v411
          %v413 = vld [vmem:[#allocation8] sm:$0x1]
          %v414 = vadd.f32 %v413, %v412
          %415 = vst.msk [vmem:[#allocation8] sm:$0x1] %vm401, %v414
        $region60: #{tpu_custom_call.1} parent=31 // pred_fallthru
          _
        %p416 = scmp.eq.s32.totalorder %s26, %s27
        // Predicated region
        $region61: #{tpu_custom_call.1} parent=31 // pred_check
          %p417 = pneg %p416
        $region62: #{tpu_custom_call.1} parent=31 // pred_check_branch
          %419 = sbr.rel (%p417) target = $region64
        $region63: #{tpu_custom_call.1} parent=31 // pred_region
          %v420 = vld [vmem:[#allocation5] sm:$0xff]
          %v421 = vmul.f32 %v225, %v226
          %v422 = vsel %vm227, %v421, 0.0
          %423 = vadd.xlane.f32.xlu0 %v422
          %v424 = vpop.xlane.xlu0 %423
          %v425 = vadd.f32 %v420, %v424
          %426 = vst.msk [vmem:[#allocation5] sm:$0xff] %vm346, %v425
        $region64: #{tpu_custom_call.1} parent=31 // pred_fallthru
          _
        %p427 = pnand %p404, %p349
        %p428 = pneg %p427
        // Predicated region
        $region65: #{tpu_custom_call.1} parent=31 // pred_check
          _
        $region66: #{tpu_custom_call.1} parent=31 // pred_check_branch
          %430 = sbr.rel (%p427) target = $region68
        $region67: #{tpu_custom_call.1} parent=31 // pred_region
          %v431 = vld [vmem:[#allocation4] sm:$0xff]
          %v432 = vsel %vm346, %v431, 0.0
          %433 = vadd.xlane.f32.xlu0 %v432
          %v434 = vpop.xlane.xlu0 %433
          %v435 = vrot.slane %v434, 4
          %v436 = vadd.f32 %v434, %v435
          %v437 = vrot.slane %v436, 2
          %v438 = vadd.f32 %v436, %v437
          %v439 = vrot.slane %v438, 1
          %v440 = vadd.f32 %v438, %v439
          %s441 = vtos %v440
          %v442 = vld [vmem:[#allocation8] sm:$0x1]
          %v443 = vsel %vm401, %v442, 0.0
          %444 = vadd.xlane.f32.xlu0 %v443
          %v445 = vpop.xlane.xlu0 %444
          %v446 = vrot.slane %v445, 4
          %v447 = vadd.f32 %v445, %v446
          %v448 = vrot.slane %v447, 2
          %v449 = vadd.f32 %v447, %v448
          %v450 = vrot.slane %v449, 1
          %v451 = vadd.f32 %v449, %v450
          %s452 = vtos %v451
          %v453 = vld [vmem:[#allocation5] sm:$0xff]
          %v454 = vsel %vm346, %v453, 0.0
          %455 = vadd.xlane.f32.xlu0 %v454
          %v456 = vpop.xlane.xlu0 %455
          %v457 = vrot.slane %v456, 4
          %v458 = vadd.f32 %v456, %v457
          %v459 = vrot.slane %v458, 2
          %v460 = vadd.f32 %v458, %v459
          %v461 = vrot.slane %v460, 1
          %v462 = vadd.f32 %v460, %v461
          %s463 = vtos %v462
          %s464 = smul.f32 %s224, %s463
          %s465 = sadd.f32 %s441, %s452
          %s466 = smul.f32 %s464, 2.0
          %s467 = ssub.f32 %s465, %s466
          %v468 = vrcp.pop 48.0
          %s469 = vtos %v468
          %s470 = smul.f32 %s467, %s469
          %v471 = vstv %s470
          %472 = vst [vmem:[#allocation15] sm:$0x1] %v471
        $region68: #{tpu_custom_call.1} parent=31 // pred_fallthru
          _
        // Predicated region
        $region69: #{tpu_custom_call.1} parent=31 // pred_check
          %p473 = pneg %p120
        $region70: #{tpu_custom_call.1} parent=31 // pred_check_branch
          %475 = sbr.rel (%p473) target = $region72
        $region71: #{tpu_custom_call.1} parent=31 // pred_region
          %s477 = ssub.s32 16, 16
          %478 = vsyncadd [#allocation12], %s477
          %s480 = sshll.u32 [#allocation15], 4
          %s481 = int_to_ptr.vmem [resolvable:$true] %s480
          %483 = dma.vmem_to_hbm [thread:$0]  %s481, 16, %s3, [#allocation12]
        $region72: #{tpu_custom_call.1} parent=31 // pred_fallthru
          _
        // Predicated region
        $region73: #{tpu_custom_call.1} parent=31 // pred_check
          %p484 = pneg %p120
        $region74: #{tpu_custom_call.1} parent=31 // pred_check_branch
          %486 = sbr.rel (%p484) target = $region76
        $region75: #{tpu_custom_call.1} parent=31 // pred_region
          %487 = dma.done [#allocation12], 16
        $region76: #{tpu_custom_call.1} parent=31 // pred_fallthru
          _
      $region32: #{tpu_custom_call.1} parent=5 // pred_fallthru
        _
      %p488 = scmp.le.s32.totalorder 2, %s17
      // Predicated region
      $region77: #{tpu_custom_call.1} parent=5 // pred_check
        %p489 = pneg %p488
      $region78: #{tpu_custom_call.1} parent=5 // pred_check_branch
        %491 = sbr.rel (%p489) target = $region80
      $region79: #{tpu_custom_call.1} parent=5 // pred_region
        %s492 = ssub.s32 %s17, 2
      $region80: #{tpu_custom_call.1} parent=5 // pred_fallthru
        _
    $region6: #{tpu_custom_call.1} parent=1 // loop_footer
      %s21 = sadd.s32 1, %s17
    $region7: #{tpu_custom_call.1} parent=1 // loop_footer_branch
      %16 = sbr.rel target = $region3
    $region8: #{tpu_custom_call.1} parent=1 // loop_exit
      _
    %493 = vsyncpa [#allocation11], 1
    %s494 = scalar_lea.sflag [#allocation11], 1
    %495 = vsyncpa %s494, 1
    %496 = vsyncpa [#allocation14], 1
    %s497 = scalar_lea.sflag [#allocation14], 1
    %498 = vsyncpa %s497, 1
    %499 = vsyncpa [#allocation12], 1
    %s500 = scalar_lea.sflag [#allocation12], 1
    %501 = vsyncpa %s500, 1

</llo_original>
